<compile_context>
chip_gen: v6e
topology: v6e:2x2x1
jax: 0.10.0
libtpu: 0.0.40
codegen_flags: <defaults>
</compile_context>

<pallas_src>
import jax
import jax.numpy as jnp
from jax.experimental import pallas as pl
from jax.experimental.pallas import tpu as pltpu

_LANE = 128
_SUB = 8


def _round_up(x, m):
    return ((x + m - 1) // m) * m


def _chip_info():
    """Best-effort (per-core VMEM bytes, has-2-TensorCores); safe fallbacks."""
    vmem_cap = None
    try:
        vmem_cap = int(pltpu.get_tpu_info().vmem_capacity_bytes)
    except Exception:
        vmem_cap = None
    kind = ""
    try:
        kind = jax.devices()[0].device_kind.lower()
    except Exception:
        pass
    if not vmem_cap or vmem_cap <= 0:
        vmem_cap = 64 << 20                      # conservative: fits every gen
    vmem_cap = min(vmem_cap, 128 << 20)
    if "7" in kind:                              # v7x: 64 MiB per TensorCore
        vmem_cap = min(vmem_cap, 64 << 20)
    two_tc = any(t in kind for t in ("v4", "v5p", "7"))   # megacore / v7x
    return vmem_cap, two_tc


# ----------------------------------------------------------------------------
# Single-pass kernel: block = (Bt, C, HW); pooling + fused FC + scale in one go.
# ----------------------------------------------------------------------------
def _make_single_pass_kernel(HW, Bt):
    inv_hw = 1.0 / HW

    def kernel(x_ref, w1_ref, w2_ref, o_ref):
        x = x_ref[...]                                      # (Bt, C, HW), native dtype
        # f32-accumulated global pooling.  Reductions respect the logical HW
        # extent, so no lane mask / iota is needed even when HW % 128 != 0.
        avg = jnp.sum(x, axis=2, dtype=jnp.float32) * inv_hw          # (Bt, C)
        mx = jnp.max(x, axis=2).astype(jnp.float32)                   # (Bt, C)

        w1 = w1_ref[...].astype(jnp.float32)                # (Cr, C)
        w2 = w2_ref[...].astype(jnp.float32)                # (C, Cr)

        # Fused FC: run avg and max through one w1 -> ReLU -> w2 chain.
        pooled = jnp.concatenate([avg, mx], axis=0)         # (2*Bt, C)
        h = jax.lax.dot_general(pooled, w1, (((1,), (1,)), ((), ())),
                                preferred_element_type=jnp.float32)   # (2*Bt, Cr)
        h = jnp.maximum(h, 0.0)
        out2 = jax.lax.dot_general(h, w2, (((1,), (1,)), ((), ())),
                                   preferred_element_type=jnp.float32)  # (2*Bt, C)
        att = jax.nn.sigmoid(out2[:Bt] + out2[Bt:])         # (Bt, C), f32

        o_ref[...] = att.astype(x.dtype)[:, :, None] * x

    return kernel


def _single_pass(x, w1, w2, HW, budget, vmem_cap, two_tc, w_bytes):
    B, C, _ = x.shape
    Cr = w1.shape[0]
    itemsize = jnp.dtype(x.dtype).itemsize

    # VMEM footprint of one batch within a block (account for (8,128) tiling).
    one_batch = _round_up(C, _SUB) * _round_up(HW, _LANE) * itemsize
    bt_cap = min(B, max(1, budget // one_batch))
    # Only split batches across grid steps when 2 TensorCores can share the grid;
    # on 1-TC chips (v5e/v6e) that split is pure per-step overhead.
    if two_tc and B >= 2:
        bt_cap = min(bt_cap, max(1, (B + 1) // 2))
    Bt = bt_cap
    grid_b = pl.cdiv(B, Bt)        # ragged leading block OK (tail rows discarded)

    block_bytes = Bt * one_batch
    need = 4 * block_bytes + 2 * w_bytes + (8 << 20)
    vmem_limit = int(min(max(need, 32 << 20), vmem_cap - (4 << 20)))

    return pl.pallas_call(
        _make_single_pass_kernel(HW, Bt),
        out_shape=jax.ShapeDtypeStruct((B, C, HW), x.dtype),
        grid_spec=pltpu.PrefetchScalarGridSpec(
            num_scalar_prefetch=0,
            grid=(grid_b,),
            in_specs=[
                pl.BlockSpec((Bt, C, HW), lambda b: (b, 0, 0)),
                pl.BlockSpec((Cr, C), lambda b: (0, 0)),
                pl.BlockSpec((C, Cr), lambda b: (0, 0)),
            ],
            out_specs=pl.BlockSpec((Bt, C, HW), lambda b: (b, 0, 0)),
        ),
        compiler_params=pltpu.CompilerParams(
            dimension_semantics=("parallel",),
            vmem_limit_bytes=vmem_limit,
        ),
    )(x, w1, w2)


# ----------------------------------------------------------------------------
# Two-pass path for large C*HW blocks (e.g. v7x's smaller per-TC VMEM).
# Pass 1: tile HW ("arbitrary" reduction axis), accumulate sum/max in VMEM
#         scratch (mask only on the boundary tile), emit per-(b, c) attention.
# Pass 2: stream the broadcast scale, fully parallel grid.
# ----------------------------------------------------------------------------
def _pick_tile(max_lanes, HW):
    if max_lanes >= HW:
        return HW                                  # full extent: always legal
    return max(_LANE, (max_lanes // _LANE) * _LANE)


def _make_pool_att_kernel(HW, tHW, nHW):
    rem = HW - (nHW - 1) * tHW                     # valid lanes in the final tile
    inv_hw = 1.0 / HW

    def accumulate(x, sum_sc, max_sc):
        sum_sc[...] += jnp.sum(x, axis=1, keepdims=True, dtype=jnp.float32)
        max_sc[...] = jnp.maximum(
            max_sc[...], jnp.max(x, axis=1, keepdims=True).astype(jnp.float32))

    def kernel(x_ref, w1_ref, w2_ref, att_ref, sum_sc, max_sc):
        j = pl.program_id(1)

        @pl.when(j == 0)
        def _():
            sum_sc[...] = jnp.zeros_like(sum_sc)
            max_sc[...] = jnp.full_like(max_sc, -jnp.inf)

        x = x_ref[...]                             # (C, tHW)
        if rem == tHW:
            # HW divides evenly into tiles: every tile is fully valid.
            accumulate(x, sum_sc, max_sc)
        else:
            # Only the tile containing the HW boundary pays the mask.
            @pl.when(j < nHW - 1)
            def _():
                accumulate(x, sum_sc, max_sc)

            @pl.when(j == nHW - 1)
            def _():
                lane = jax.lax.broadcasted_iota(jnp.int32, (1, tHW), 1)
                valid = lane < rem                 # (1, tHW), broadcasts over C
                xs = jnp.where(valid, x, jnp.array(0, dtype=x.dtype))
                xm = jnp.where(valid, x, jnp.array(-jnp.inf, dtype=x.dtype))
                sum_sc[...] += jnp.sum(xs, axis=1, keepdims=True, dtype=jnp.float32)
                max_sc[...] = jnp.maximum(
                    max_sc[...],
                    jnp.max(xm, axis=1, keepdims=True).astype(jnp.float32))

        @pl.when(j == nHW - 1)
        def _():
            # Tiny channel MLP; runs once per batch, off the streaming path.
            w1 = w1_ref[...].astype(jnp.float32)   # (Cr, C)
            w2 = w2_ref[...].astype(jnp.float32)   # (C, Cr)
            pooled = jnp.concatenate([sum_sc[...] * inv_hw, max_sc[...]], axis=1)  # (C, 2)
            h = jnp.maximum(
                jnp.dot(w1, pooled, preferred_element_type=jnp.float32), 0.0)      # (Cr, 2)
            out2 = jnp.dot(w2, h, preferred_element_type=jnp.float32)              # (C, 2)
            att_ref[...] = jax.nn.sigmoid(out2[:, 0:1] + out2[:, 1:2])             # (C, 1)

    return kernel


def _scale_kernel(att_ref, x_ref, o_ref):
    x = x_ref[...]                                 # (C, tHW)
    o_ref[...] = att_ref[...].astype(x.dtype) * x  # broadcast over lanes


def _two_pass(x, w1, w2, HW, budget, vmem_cap, w_bytes):
    B, C, _ = x.shape
    Cr = w1.shape[0]
    itemsize = jnp.dtype(x.dtype).itemsize
    c_bytes = _round_up(C, _SUB) * itemsize

    # Pass 1 only streams the input (no tHW-sized output block), so it can use
    # ~2x the tile width of pass 2 from the same VMEM budget.
    t1 = _pick_tile((2 * budget) // c_bytes, HW)
    t2 = _pick_tile(budget // c_bytes, HW)
    n1 = pl.cdiv(HW, t1)
    n2 = pl.cdiv(HW, t2)

    def _limit(n_big_blocks, t):
        need = (n_big_blocks * _round_up(C, _SUB) * _round_up(t, _LANE) * itemsize
                + 2 * w_bytes + (8 << 20))
        return int(min(max(need, 32 << 20), vmem_cap - (4 << 20)))

    att = pl.pallas_call(
        _make_pool_att_kernel(HW, t1, n1),
        out_shape=jax.ShapeDtypeStruct((B, C, 1), jnp.float32),
        grid_spec=pltpu.PrefetchScalarGridSpec(
            num_scalar_prefetch=0,
            grid=(B, n1),
            in_specs=[
                pl.BlockSpec((None, C, t1), lambda b, j: (b, 0, j)),
                pl.BlockSpec((Cr, C), lambda b, j: (0, 0)),
                pl.BlockSpec((C, Cr), lambda b, j: (0, 0)),
            ],
            out_specs=pl.BlockSpec((None, C, 1), lambda b, j: (b, 0, 0)),
            scratch_shapes=[
                pltpu.VMEM((C, 1), jnp.float32),   # running sum
                pltpu.VMEM((C, 1), jnp.float32),   # running max
            ],
        ),
        compiler_params=pltpu.CompilerParams(
            dimension_semantics=("parallel", "arbitrary"),
            vmem_limit_bytes=_limit(2, t1),
        ),
    )(x, w1, w2)

    out = pl.pallas_call(
        _scale_kernel,
        out_shape=jax.ShapeDtypeStruct((B, C, HW), x.dtype),
        grid_spec=pltpu.PrefetchScalarGridSpec(
            num_scalar_prefetch=0,
            grid=(B, n2),
            in_specs=[
                pl.BlockSpec((None, C, 1), lambda b, j: (b, 0, 0)),
                pl.BlockSpec((None, C, t2), lambda b, j: (b, 0, j)),
            ],
            out_specs=pl.BlockSpec((None, C, t2), lambda b, j: (b, 0, j)),
        ),
        compiler_params=pltpu.CompilerParams(
            dimension_semantics=("parallel", "parallel"),
            vmem_limit_bytes=_limit(4, t2),
        ),
    )(att, x)
    return out


# ----------------------------------------------------------------------------
# Public wrapper
# ----------------------------------------------------------------------------
def channel_attention(x_nchw, w1, w2, *, block_budget_bytes=None):
    """x_nchw: (B, C, H, W); w1: (C//ratio, C); w2: (C, C//ratio)."""
    B, C, H, W = x_nchw.shape
    HW = H * W
    x = x_nchw.reshape(B, C, HW)     # no spatial pad/slice: kernels take HW as-is
    itemsize = jnp.dtype(x.dtype).itemsize
    w_bytes = int(w1.size * jnp.dtype(w1.dtype).itemsize
                  + w2.size * jnp.dtype(w2.dtype).itemsize)

    vmem_cap, two_tc = _chip_info()
    if block_budget_bytes is None:
        # Per-chip budget: ~75% of per-core VMEM split over double-buffered
        # in+out blocks, weights and headroom.
        usable = (vmem_cap * 3) // 4
        block_budget_bytes = max(1 << 20, (usable - 2 * w_bytes - (4 << 20)) // 4)

    one_batch = _round_up(C, _SUB) * _round_up(HW, _LANE) * itemsize
    if one_batch <= block_budget_bytes:
        out = _single_pass(x, w1, w2, HW, block_budget_bytes, vmem_cap, two_tc, w_bytes)
    else:
        out = _two_pass(x, w1, w2, HW, block_budget_bytes, vmem_cap, w_bytes)
    return out.reshape(B, C, H, W)


def channel_attention_ref(x, w1, w2):
    # Pure-JAX reference mirroring the PyTorch forward.
    xf = x.astype(jnp.float32)
    avg = jnp.mean(xf, axis=(2, 3))   # (B, C)
    mx = jnp.max(xf, axis=(2, 3))     # (B, C)

    def fc(v):
        h = jnp.maximum(v @ w1.astype(jnp.float32).T, 0.0)
        return h @ w2.astype(jnp.float32).T

    att = jax.nn.sigmoid(fc(avg) + fc(mx))
    return (att[:, :, None, None] * xf).astype(x.dtype)


def _run_case(key, B, C, H, W, ratio, **kw):
    kx, k1, k2 = jax.random.split(key, 3)
    Cr = C // ratio
    x = jax.random.normal(kx, (B, C, H, W), dtype=jnp.float32)
    w1 = jax.random.normal(k1, (Cr, C), dtype=jnp.float32) * (1.0 / jnp.sqrt(C))
    w2 = jax.random.normal(k2, (C, Cr), dtype=jnp.float32) * (1.0 / jnp.sqrt(Cr))
    out = jax.block_until_ready(channel_attention(x, w1, w2, **kw))
    ref = channel_attention_ref(x, w1, w2)
    assert out.shape == (B, C, H, W)
    assert jnp.allclose(out, ref, atol=2e-5, rtol=2e-5), \
        f"mismatch vs reference for shape {(B, C, H, W)}"


if __name__ == "__main__":
    key = jax.random.PRNGKey(0)
    k1, k2, k3, k4 = jax.random.split(key, 4)

    # 1) Main case: single-pass path, HW already a multiple of 128.
    _run_case(k1, B=2, C=64, H=16, W=16, ratio=16)

    # 2) Non-multiple-of-128 spatial size: exercises full-extent last-dim blocks
    #    (no wrapper pad/slice) and masked partial-lane stores.
    _run_case(k2, B=2, C=32, H=7, W=7, ratio=16)

    # 3) Batch not divisible by the Bt pack: exercises the ragged cdiv grid.
    _run_case(k3, B=3, C=32, H=10, W=10, ratio=8, block_budget_bytes=40 * 1024)

    # 4) Force the two-pass (HW-tiled, VMEM-bounded) path with a tiny budget:
    #    exercises multi-tile sum/max accumulation, boundary-tile masking and
    #    partial blocks in the scale pass.
    _run_case(k4, B=2, C=64, H=20, W=20, ratio=16, block_budget_bytes=32 * 1024)

    print("KERNEL_OK")
</pallas_src>

<mosaic_0001>
module attributes {stable_mosaic.version = 11 : i64} {
  func.func @kernel(%arg0: i32, %arg1: memref<2x64x256xf32, #tpu.memory_space<vmem>>, %arg2: memref<4x64xf32, #tpu.memory_space<vmem>>, %arg3: memref<64x4xf32, #tpu.memory_space<vmem>>, %arg4: memref<2x64x256xf32, #tpu.memory_space<vmem>>) attributes {dimension_semantics = [#tpu.dimension_semantics<parallel>], iteration_bounds = array<i64: 1>, scalar_prefetch = 0 : i64, scratch_operands = 0 : i64, tpu.core_type = #tpu.core_type<tc>, window_params = [{transform_indices = @transform_0, window_bounds = array<i64: 2, 64, 256>}, {pipeline_mode = #tpu.pipeline_mode<synchronous>, transform_indices = @transform_1, window_bounds = array<i64: 4, 64>}, {pipeline_mode = #tpu.pipeline_mode<synchronous>, transform_indices = @transform_2, window_bounds = array<i64: 64, 4>}, {transform_indices = @transform_3, window_bounds = array<i64: 2, 64, 256>}]} {
    %c0 = arith.constant 0 : index
    %c0_0 = arith.constant 0 : index
    %c0_1 = arith.constant 0 : index
    %0 = vector.load %arg1[%c0, %c0_0, %c0_1] : memref<2x64x256xf32, #tpu.memory_space<vmem>>, vector<2x64x256xf32>
    %cst = arith.constant dense<0.000000e+00> : vector<2x64xf32>
    %1 = vector.multi_reduction <add>, %0, %cst [2] : vector<2x64x256xf32> to vector<2x64xf32>
    %cst_2 = arith.constant 3.906250e-03 : f32
    %2 = vector.broadcast %cst_2 : f32 to vector<2x64xf32>
    %3 = arith.mulf %1, %2 : vector<2x64xf32>
    %cst_3 = arith.constant dense<0xFF800000> : vector<2x64xf32>
    %4 = vector.multi_reduction <maximumf>, %0, %cst_3 [2] : vector<2x64x256xf32> to vector<2x64xf32>
    %c0_4 = arith.constant 0 : index
    %c0_5 = arith.constant 0 : index
    %5 = vector.load %arg2[%c0_4, %c0_5] : memref<4x64xf32, #tpu.memory_space<vmem>>, vector<4x64xf32>
    %c0_6 = arith.constant 0 : index
    %c0_7 = arith.constant 0 : index
    %6 = vector.load %arg3[%c0_6, %c0_7] : memref<64x4xf32, #tpu.memory_space<vmem>>, vector<64x4xf32>
    %7 = tpu.concatenate %3, %4 in 0 : vector<2x64xf32>, vector<2x64xf32> -> vector<4x64xf32>
    %cst_8 = arith.constant dense<0.000000e+00> : vector<4x4xf32>
    %8 = tpu.matmul %7, %5, %cst_8 {dimension_numbers = #tpu.dot_dimension_numbers<[1], [1], [0], [0], [0, 0, 1, 0], [], []>} : vector<4x64xf32>, vector<4x64xf32>, vector<4x4xf32> -> vector<4x4xf32>
    %cst_9 = arith.constant 0.000000e+00 : f32
    %9 = vector.broadcast %cst_9 : f32 to vector<4x4xf32>
    %10 = arith.maximumf %8, %9 : vector<4x4xf32>
    %cst_10 = arith.constant dense<0.000000e+00> : vector<4x64xf32>
    %11 = tpu.matmul %10, %6, %cst_10 {dimension_numbers = #tpu.dot_dimension_numbers<[1], [1], [0], [0], [0, 0, 1, 0], [], []>} : vector<4x4xf32>, vector<64x4xf32>, vector<4x64xf32> -> vector<4x64xf32>
    %12 = vector.extract_strided_slice %11 {offsets = [0, 0], sizes = [2, 64], strides = [1, 1]} : vector<4x64xf32> to vector<2x64xf32>
    %13 = vector.extract_strided_slice %11 {offsets = [2, 0], sizes = [2, 64], strides = [1, 1]} : vector<4x64xf32> to vector<2x64xf32>
    %14 = arith.addf %12, %13 : vector<2x64xf32>
    %15 = arith.negf %14 : vector<2x64xf32>
    %16 = math.exp %15 : vector<2x64xf32>
    %cst_11 = arith.constant 1.000000e+00 : f32
    %17 = vector.broadcast %cst_11 : f32 to vector<2x64xf32>
    %18 = arith.addf %17, %16 : vector<2x64xf32>
    %19 = arith.divf %17, %18 : vector<2x64xf32>
    %20 = vector.shape_cast %19 : vector<2x64xf32> to vector<2x64x1xf32>
    %21 = vector.broadcast %20 : vector<2x64x1xf32> to vector<2x64x256xf32>
    %22 = arith.mulf %21, %0 : vector<2x64x256xf32>
    %c0_12 = arith.constant 0 : index
    %c0_13 = arith.constant 0 : index
    %c0_14 = arith.constant 0 : index
    %23 = vector.load %arg4[%c0_12, %c0_13, %c0_14] : memref<2x64x256xf32, #tpu.memory_space<vmem>>, vector<2x64x256xf32>
    tpu.vector_store %arg4[%c0_12, %c0_13, %c0_14], %22 {strides = array<i32>} : memref<2x64x256xf32, #tpu.memory_space<vmem>>, vector<2x64x256xf32>,
    return
  }
  func.func @transform_0(%arg0: i32) -> (i32, i32, i32) {
    %c0_i32 = arith.constant 0 : i32
    %c0_i32_0 = arith.constant 0 : i32
    %c0_i32_1 = arith.constant 0 : i32
    return %arg0, %c0_i32, %c0_i32_0 : i32, i32, i32
  }
  func.func @transform_1(%arg0: i32) -> (i32, i32) {
    %c0_i32 = arith.constant 0 : i32
    %c0_i32_0 = arith.constant 0 : i32
    %c0_i32_1 = arith.constant 0 : i32
    return %c0_i32, %c0_i32_0 : i32, i32
  }
  func.func @transform_2(%arg0: i32) -> (i32, i32) {
    %c0_i32 = arith.constant 0 : i32
    %c0_i32_0 = arith.constant 0 : i32
    %c0_i32_1 = arith.constant 0 : i32
    return %c0_i32, %c0_i32_0 : i32, i32
  }
  func.func @transform_3(%arg0: i32) -> (i32, i32, i32) {
    %c0_i32 = arith.constant 0 : i32
    %c0_i32_0 = arith.constant 0 : i32
    %c0_i32_1 = arith.constant 0 : i32
    return %arg0, %c0_i32, %c0_i32_0 : i32, i32, i32
  }
}

</mosaic_0001>

<llo_original>
// kernel: tpu_custom_call.1
$region0: #{tpu_custom_call.1}
  #allocation0 [shape = 'u32[]', space=smem, size = 0x4, offset = 0x4, fixed_abs, tag = 'smem constant byte address 0x4 - core index']
  #allocation1 [shape = 'u32[144,128]{1,0:T(1,128)}', space=vmem, size = 0x12000, scoped, tag = 'internal scratch']
  %s0 = inlined_call_operand.hbm [shape: f32[2,64,256], index: 0, kind: input, shape index: {}]
  %s1 = inlined_call_operand.vmem [shape: f32[4,64], index: 1, kind: input, shape index: {}]
  %s2 = inlined_call_operand.vmem [shape: f32[64,4], index: 2, kind: input, shape index: {}]
  %s3 = inlined_call_operand.hbm [shape: f32[2,64,256], index: 3, kind: output, shape index: {}]
  %s4 = sld [smem:[#allocation0]]
  $region26: #{tpu_custom_call.1} parent=0
    _
  %s6 = ssub.s32 1, %s4
  %s7 = scalar_select 0, %s6, %s4
  $region1: #{tpu_custom_call.1} parent=0
    #allocation2 [shape = 'u8[131072]{0}', space=vmem, size = 0x20000, scoped, tag = 'input window, operand 0, single buffered']
    #allocation3 [shape = 's32[1]{0}', space=sflag, size = 0x4, scoped, tag = 'scoped memory for tpu_custom_call.1']
    #allocation4 [shape = 's32[1]{0}', space=sflag, size = 0x4, scoped, tag = 'scoped memory for tpu_custom_call.1']
    #allocation5 [shape = 'u8[131072]{0}', space=vmem, size = 0x20000, scoped, tag = 'output window, operand 0, single buffered']
    %8 = vsyncpa [#allocation3], 0
    %9 = vsyncpa [#allocation4], 0
    // Predicated region
    $region2: #{tpu_custom_call.1} parent=1 // pred_check
      _
    $region3: #{tpu_custom_call.1} parent=1 // pred_check_branch
      %11 = sbr.rel (0) target = $region5
    $region4: #{tpu_custom_call.1} parent=1 // pred_region
      %s13 = ssub.s32 4096, 4096
      %14 = vsyncadd [#allocation3], %s13
      %s15 = sshll.u32 [#allocation2], 4
      %s16 = int_to_ptr.vmem [resolvable:$true] %s15
      %21 = dma.hbm_to_vmem [thread:$0]  %s0, 4096, %s16, [#allocation3], 256, 256, 16
    $region5: #{tpu_custom_call.1} parent=1 // pred_fallthru
      _
    // Predicated region
    $region6: #{tpu_custom_call.1} parent=1 // pred_check
      _
    $region7: #{tpu_custom_call.1} parent=1 // pred_check_branch
      %23 = sbr.rel (0) target = $region9
    $region8: #{tpu_custom_call.1} parent=1 // pred_region
      _
    $region9: #{tpu_custom_call.1} parent=1 // pred_fallthru
      _
    // Predicated region
    $region10: #{tpu_custom_call.1} parent=1 // pred_check
      _
    $region11: #{tpu_custom_call.1} parent=1 // pred_check_branch
      %25 = sbr.rel (0) target = $region13
    $region12: #{tpu_custom_call.1} parent=1 // pred_region
      _
    $region13: #{tpu_custom_call.1} parent=1 // pred_fallthru
      _
    // Predicated region
    $region14: #{tpu_custom_call.1} parent=1 // pred_check
      _
    $region15: #{tpu_custom_call.1} parent=1 // pred_check_branch
      %27 = sbr.rel (0) target = $region17
    $region16: #{tpu_custom_call.1} parent=1 // pred_region
      %28 = dma.done [#allocation3], 4096
    $region17: #{tpu_custom_call.1} parent=1 // pred_fallthru
      _
    %v29 = vld [vmem:[#allocation2] sm:$0xff]
    %v30 = vld [vmem:[#allocation2 + $0x8] sm:$0xff]
    %v31 = vld [vmem:[#allocation2 + $0x10] sm:$0xff]
    %v32 = vld [vmem:[#allocation2 + $0x18] sm:$0xff]
    %v33 = vld [vmem:[#allocation2 + $0x20] sm:$0xff]
    %v34 = vld [vmem:[#allocation2 + $0x28] sm:$0xff]
    %v35 = vld [vmem:[#allocation2 + $0x30] sm:$0xff]
    %v36 = vld [vmem:[#allocation2 + $0x38] sm:$0xff]
    %v37 = vld [vmem:[#allocation2 + $0x40] sm:$0xff]
    %v38 = vld [vmem:[#allocation2 + $0x48] sm:$0xff]
    %v39 = vld [vmem:[#allocation2 + $0x50] sm:$0xff]
    %v40 = vld [vmem:[#allocation2 + $0x58] sm:$0xff]
    %v41 = vld [vmem:[#allocation2 + $0x60] sm:$0xff]
    %v42 = vld [vmem:[#allocation2 + $0x68] sm:$0xff]
    %v43 = vld [vmem:[#allocation2 + $0x70] sm:$0xff]
    %v44 = vld [vmem:[#allocation2 + $0x78] sm:$0xff]
    %v45 = vld [vmem:[#allocation2 + $0x80] sm:$0xff]
    %v46 = vld [vmem:[#allocation2 + $0x88] sm:$0xff]
    %v47 = vld [vmem:[#allocation2 + $0x90] sm:$0xff]
    %v48 = vld [vmem:[#allocation2 + $0x98] sm:$0xff]
    %v49 = vld [vmem:[#allocation2 + $0xa0] sm:$0xff]
    %v50 = vld [vmem:[#allocation2 + $0xa8] sm:$0xff]
    %v51 = vld [vmem:[#allocation2 + $0xb0] sm:$0xff]
    %v52 = vld [vmem:[#allocation2 + $0xb8] sm:$0xff]
    %v53 = vld [vmem:[#allocation2 + $0xc0] sm:$0xff]
    %v54 = vld [vmem:[#allocation2 + $0xc8] sm:$0xff]
    %v55 = vld [vmem:[#allocation2 + $0xd0] sm:$0xff]
    %v56 = vld [vmem:[#allocation2 + $0xd8] sm:$0xff]
    %v57 = vld [vmem:[#allocation2 + $0xe0] sm:$0xff]
    %v58 = vld [vmem:[#allocation2 + $0xe8] sm:$0xff]
    %v59 = vld [vmem:[#allocation2 + $0xf0] sm:$0xff]
    %v60 = vld [vmem:[#allocation2 + $0xf8] sm:$0xff]
    %v61 = vadd.f32 %v29, %v30
    %62 = vadd.xlane.f32.xlu0 %v61
    %v63 = vpop.xlane.xlu0 %62
    %v64 = vadd.f32 %v31, %v32
    %65 = vadd.xlane.f32.xlu0 %v64
    %v66 = vpop.xlane.xlu0 %65
    %v67 = vadd.f32 %v33, %v34
    %68 = vadd.xlane.f32.xlu0 %v67
    %v69 = vpop.xlane.xlu0 %68
    %v70 = vadd.f32 %v35, %v36
    %71 = vadd.xlane.f32.xlu0 %v70
    %v72 = vpop.xlane.xlu0 %71
    %v73 = vadd.f32 %v37, %v38
    %74 = vadd.xlane.f32.xlu0 %v73
    %v75 = vpop.xlane.xlu0 %74
    %v76 = vadd.f32 %v39, %v40
    %77 = vadd.xlane.f32.xlu0 %v76
    %v78 = vpop.xlane.xlu0 %77
    %v79 = vadd.f32 %v41, %v42
    %80 = vadd.xlane.f32.xlu0 %v79
    %v81 = vpop.xlane.xlu0 %80
    %v82 = vadd.f32 %v43, %v44
    %83 = vadd.xlane.f32.xlu0 %v82
    %v84 = vpop.xlane.xlu0 %83
    %v85 = vadd.f32 %v45, %v46
    %86 = vadd.xlane.f32.xlu0 %v85
    %v87 = vpop.xlane.xlu0 %86
    %v88 = vadd.f32 %v47, %v48
    %89 = vadd.xlane.f32.xlu0 %v88
    %v90 = vpop.xlane.xlu0 %89
    %v91 = vadd.f32 %v49, %v50
    %92 = vadd.xlane.f32.xlu0 %v91
    %v93 = vpop.xlane.xlu0 %92
    %v94 = vadd.f32 %v51, %v52
    %95 = vadd.xlane.f32.xlu0 %v94
    %v96 = vpop.xlane.xlu0 %95
    %v97 = vadd.f32 %v53, %v54
    %98 = vadd.xlane.f32.xlu0 %v97
    %v99 = vpop.xlane.xlu0 %98
    %v100 = vadd.f32 %v55, %v56
    %101 = vadd.xlane.f32.xlu0 %v100
    %v102 = vpop.xlane.xlu0 %101
    %v103 = vadd.f32 %v57, %v58
    %104 = vadd.xlane.f32.xlu0 %v103
    %v105 = vpop.xlane.xlu0 %104
    %v106 = vadd.f32 %v59, %v60
    %107 = vadd.xlane.f32.xlu0 %v106
    %v108 = vpop.xlane.xlu0 %107
    %v109 = vmul.f32 %v63, 0.00390625
    %v110 = vmul.f32 %v66, 0.00390625
    %v111 = vmul.f32 %v69, 0.00390625
    %v112 = vmul.f32 %v72, 0.00390625
    %v113 = vmul.f32 %v75, 0.00390625
    %v114 = vmul.f32 %v78, 0.00390625
    %v115 = vmul.f32 %v81, 0.00390625
    %v116 = vmul.f32 %v84, 0.00390625
    %v117 = vmul.f32 %v87, 0.00390625
    %v118 = vmul.f32 %v90, 0.00390625
    %v119 = vmul.f32 %v93, 0.00390625
    %v120 = vmul.f32 %v96, 0.00390625
    %v121 = vmul.f32 %v99, 0.00390625
    %v122 = vmul.f32 %v102, 0.00390625
    %v123 = vmul.f32 %v105, 0.00390625
    %v124 = vmul.f32 %v108, 0.00390625
    %v125 = vmax.f32 %v29, %v30
    %126 = vmax.xlane.f32.xlu0 %v125
    %v127 = vpop.xlane.xlu0 %126
    %v128 = vmax.f32 %v31, %v32
    %129 = vmax.xlane.f32.xlu0 %v128
    %v130 = vpop.xlane.xlu0 %129
    %v131 = vmax.f32 %v33, %v34
    %132 = vmax.xlane.f32.xlu0 %v131
    %v133 = vpop.xlane.xlu0 %132
    %v134 = vmax.f32 %v35, %v36
    %135 = vmax.xlane.f32.xlu0 %v134
    %v136 = vpop.xlane.xlu0 %135
    %v137 = vmax.f32 %v37, %v38
    %138 = vmax.xlane.f32.xlu0 %v137
    %v139 = vpop.xlane.xlu0 %138
    %v140 = vmax.f32 %v39, %v40
    %141 = vmax.xlane.f32.xlu0 %v140
    %v142 = vpop.xlane.xlu0 %141
    %v143 = vmax.f32 %v41, %v42
    %144 = vmax.xlane.f32.xlu0 %v143
    %v145 = vpop.xlane.xlu0 %144
    %v146 = vmax.f32 %v43, %v44
    %147 = vmax.xlane.f32.xlu0 %v146
    %v148 = vpop.xlane.xlu0 %147
    %v149 = vmax.f32 %v45, %v46
    %150 = vmax.xlane.f32.xlu0 %v149
    %v151 = vpop.xlane.xlu0 %150
    %v152 = vmax.f32 %v47, %v48
    %153 = vmax.xlane.f32.xlu0 %v152
    %v154 = vpop.xlane.xlu0 %153
    %v155 = vmax.f32 %v49, %v50
    %156 = vmax.xlane.f32.xlu0 %v155
    %v157 = vpop.xlane.xlu0 %156
    %v158 = vmax.f32 %v51, %v52
    %159 = vmax.xlane.f32.xlu0 %v158
    %v160 = vpop.xlane.xlu0 %159
    %v161 = vmax.f32 %v53, %v54
    %162 = vmax.xlane.f32.xlu0 %v161
    %v163 = vpop.xlane.xlu0 %162
    %v164 = vmax.f32 %v55, %v56
    %165 = vmax.xlane.f32.xlu0 %v164
    %v166 = vpop.xlane.xlu0 %165
    %v167 = vmax.f32 %v57, %v58
    %168 = vmax.xlane.f32.xlu0 %v167
    %v169 = vpop.xlane.xlu0 %168
    %v170 = vmax.f32 %v59, %v60
    %171 = vmax.xlane.f32.xlu0 %v170
    %v172 = vpop.xlane.xlu0 %171
    %v173 = vld [vmem:[%s1] sm:$0xf]
    %v174 = vld [vmem:[%s2] sm:$0xff]
    %v175 = vld [vmem:[%s2 + $0x8] sm:$0xff]
    %v176 = vld [vmem:[%s2 + $0x10] sm:$0xff]
    %v177 = vld [vmem:[%s2 + $0x18] sm:$0xff]
    %v178 = vld [vmem:[%s2 + $0x20] sm:$0xff]
    %v179 = vld [vmem:[%s2 + $0x28] sm:$0xff]
    %v180 = vld [vmem:[%s2 + $0x30] sm:$0xff]
    %v181 = vld [vmem:[%s2 + $0x38] sm:$0xff]
    %v198 = vlaneseq
    %v199 = vand.u32 %v198, 127
    %v200 = vlaneseq
    %v201 = vshrl.u32 %v200, 7
    %v202 = vsub.s32 %v199, %v201
    %v203 = vrot.slane %v109, %v202
    %v204 = vadd.s32 %v199, 4294967288
    %v205 = vlaneseq
    %v206 = vshrl.u32 %v205, 7
    %v207 = vsub.s32 %v204, %v206
    %v208 = vrot.slane %v110, %v207
    %vm209 = vcmask 130112
    %v210 = vsel %vm209, %v208, %v203
    %v211 = vadd.s32 %v199, 4294967280
    %v212 = vlaneseq
    %v213 = vshrl.u32 %v212, 7
    %v214 = vsub.s32 %v211, %v213
    %v215 = vrot.slane %v111, %v214
    %vm216 = vcmask 195712
    %v217 = vsel %vm216, %v215, %v210
    %v218 = vadd.s32 %v199, 4294967272
    %v219 = vlaneseq
    %v220 = vshrl.u32 %v219, 7
    %v221 = vsub.s32 %v218, %v220
    %v222 = vrot.slane %v112, %v221
    %vm223 = vcmask 261312
    %v224 = vsel %vm223, %v222, %v217
    %v225 = vadd.s32 %v199, 4294967264
    %v226 = vlaneseq
    %v227 = vshrl.u32 %v226, 7
    %v228 = vsub.s32 %v225, %v227
    %v229 = vrot.slane %v113, %v228
    %vm230 = vcmask 326912
    %v231 = vsel %vm230, %v229, %v224
    %v232 = vadd.s32 %v199, 4294967256
    %v233 = vlaneseq
    %v234 = vshrl.u32 %v233, 7
    %v235 = vsub.s32 %v232, %v234
    %v236 = vrot.slane %v114, %v235
    %vm237 = vcmask 392512
    %v238 = vsel %vm237, %v236, %v231
    %v239 = vadd.s32 %v199, 4294967248
    %v240 = vlaneseq
    %v241 = vshrl.u32 %v240, 7
    %v242 = vsub.s32 %v239, %v241
    %v243 = vrot.slane %v115, %v242
    %vm244 = vcmask 458112
    %v245 = vsel %vm244, %v243, %v238
    %v246 = vadd.s32 %v199, 4294967240
    %v247 = vlaneseq
    %v248 = vshrl.u32 %v247, 7
    %v249 = vsub.s32 %v246, %v248
    %v250 = vrot.slane %v116, %v249
    %vm251 = vcmask 523712
    %v252 = vsel %vm251, %v250, %v245
    %v253 = vlaneseq
    %v254 = vshrl.u32 %v253, 7
    %v255 = vsub.s32 %v199, %v254
    %v256 = vrot.slane %v117, %v255
    %v257 = vlaneseq
    %v258 = vshrl.u32 %v257, 7
    %v259 = vsub.s32 %v204, %v258
    %v260 = vrot.slane %v118, %v259
    %v261 = vsel %vm209, %v260, %v256
    %v262 = vlaneseq
    %v263 = vshrl.u32 %v262, 7
    %v264 = vsub.s32 %v211, %v263
    %v265 = vrot.slane %v119, %v264
    %v266 = vsel %vm216, %v265, %v261
    %v267 = vlaneseq
    %v268 = vshrl.u32 %v267, 7
    %v269 = vsub.s32 %v218, %v268
    %v270 = vrot.slane %v120, %v269
    %v271 = vsel %vm223, %v270, %v266
    %v272 = vlaneseq
    %v273 = vshrl.u32 %v272, 7
    %v274 = vsub.s32 %v225, %v273
    %v275 = vrot.slane %v121, %v274
    %v276 = vsel %vm230, %v275, %v271
    %v277 = vlaneseq
    %v278 = vshrl.u32 %v277, 7
    %v279 = vsub.s32 %v232, %v278
    %v280 = vrot.slane %v122, %v279
    %v281 = vsel %vm237, %v280, %v276
    %v282 = vlaneseq
    %v283 = vshrl.u32 %v282, 7
    %v284 = vsub.s32 %v239, %v283
    %v285 = vrot.slane %v123, %v284
    %v286 = vsel %vm244, %v285, %v281
    %v287 = vlaneseq
    %v288 = vshrl.u32 %v287, 7
    %v289 = vsub.s32 %v246, %v288
    %v290 = vrot.slane %v124, %v289
    %v291 = vsel %vm251, %v290, %v286
    %vm292 = vcmask 1041409
    %v293 = vsel %vm292, %v291, %v252
    %v311 = vlaneseq
    %v312 = vshrl.u32 %v311, 7
    %v313 = vsub.s32 %v199, %v312
    %v314 = vrot.slane %v127, %v313
    %v315 = vlaneseq
    %v316 = vshrl.u32 %v315, 7
    %v317 = vsub.s32 %v204, %v316
    %v318 = vrot.slane %v130, %v317
    %v319 = vsel %vm209, %v318, %v314
    %v320 = vlaneseq
    %v321 = vshrl.u32 %v320, 7
    %v322 = vsub.s32 %v211, %v321
    %v323 = vrot.slane %v133, %v322
    %v324 = vsel %vm216, %v323, %v319
    %v325 = vlaneseq
    %v326 = vshrl.u32 %v325, 7
    %v327 = vsub.s32 %v218, %v326
    %v328 = vrot.slane %v136, %v327
    %v329 = vsel %vm223, %v328, %v324
    %v330 = vlaneseq
    %v331 = vshrl.u32 %v330, 7
    %v332 = vsub.s32 %v225, %v331
    %v333 = vrot.slane %v139, %v332
    %v334 = vsel %vm230, %v333, %v329
    %v335 = vlaneseq
    %v336 = vshrl.u32 %v335, 7
    %v337 = vsub.s32 %v232, %v336
    %v338 = vrot.slane %v142, %v337
    %v339 = vsel %vm237, %v338, %v334
    %v340 = vlaneseq
    %v341 = vshrl.u32 %v340, 7
    %v342 = vsub.s32 %v239, %v341
    %v343 = vrot.slane %v145, %v342
    %v344 = vsel %vm244, %v343, %v339
    %v345 = vlaneseq
    %v346 = vshrl.u32 %v345, 7
    %v347 = vsub.s32 %v246, %v346
    %v348 = vrot.slane %v148, %v347
    %v349 = vsel %vm251, %v348, %v344
    %v350 = vlaneseq
    %v351 = vshrl.u32 %v350, 7
    %v352 = vsub.s32 %v199, %v351
    %v353 = vrot.slane %v151, %v352
    %v354 = vlaneseq
    %v355 = vshrl.u32 %v354, 7
    %v356 = vsub.s32 %v204, %v355
    %v357 = vrot.slane %v154, %v356
    %v358 = vsel %vm209, %v357, %v353
    %v359 = vlaneseq
    %v360 = vshrl.u32 %v359, 7
    %v361 = vsub.s32 %v211, %v360
    %v362 = vrot.slane %v157, %v361
    %v363 = vsel %vm216, %v362, %v358
    %v364 = vlaneseq
    %v365 = vshrl.u32 %v364, 7
    %v366 = vsub.s32 %v218, %v365
    %v367 = vrot.slane %v160, %v366
    %v368 = vsel %vm223, %v367, %v363
    %v369 = vlaneseq
    %v370 = vshrl.u32 %v369, 7
    %v371 = vsub.s32 %v225, %v370
    %v372 = vrot.slane %v163, %v371
    %v373 = vsel %vm230, %v372, %v368
    %v374 = vlaneseq
    %v375 = vshrl.u32 %v374, 7
    %v376 = vsub.s32 %v232, %v375
    %v377 = vrot.slane %v166, %v376
    %v378 = vsel %vm237, %v377, %v373
    %v379 = vlaneseq
    %v380 = vshrl.u32 %v379, 7
    %v381 = vsub.s32 %v239, %v380
    %v382 = vrot.slane %v169, %v381
    %v383 = vsel %vm244, %v382, %v378
    %v384 = vlaneseq
    %v385 = vshrl.u32 %v384, 7
    %v386 = vsub.s32 %v246, %v385
    %v387 = vrot.slane %v172, %v386
    %v388 = vsel %vm251, %v387, %v383
    %vm389 = vcmask 1043459
    %v390 = vsel %vm389, %v388, %v349
    %vm392 = vcmask 1041408
    %v393 = vsel %vm392, %v293, %v390
    %vm394 = vcmask 523264
    %v396 = vsel %vm394, %v393, 0
    %v399 = vsel %vm394, %v173, 0
    %401 = vmatprep.subr.mxu0 0.0
    %402 = vmatpush1.xpose.msra.mxu0 0.0
    %403 = vmatprep.subr.mxu0 0.0
    %404 = vmatpush1.xpose.msra.mxu0 0.0
    %405 = vmatprep.subr.mxu0 0.0
    %406 = vmatpush1.xpose.msra.mxu0 0.0
    %407 = vmatprep.subr.mxu0 0.0
    %408 = vmatpush1.xpose.msra.mxu0 0.0
    %409 = vmatprep.subr.mxu0 0.0
    %410 = vmatpush1.xpose.msra.mxu0 0.0
    %411 = vmatprep.subr.mxu0 0.0
    %412 = vmatpush1.xpose.msra.mxu0 0.0
    %413 = vmatprep.subr.mxu0 0.0
    %414 = vmatpush1.xpose.msra.mxu0 0.0
    %415 = vmatprep.subr.mxu0 0.0
    %416 = vmatpush1.xpose.msra.mxu0 0.0
    %417 = vmatprep.subr.mxu0 0.0
    %418 = vmatpush1.xpose.msra.mxu0 0.0
    %419 = vmatprep.subr.mxu0 0.0
    %420 = vmatpush1.xpose.msra.mxu0 0.0
    %421 = vmatprep.subr.mxu0 0.0
    %422 = vmatpush1.xpose.msra.mxu0 0.0
    %423 = vmatprep.subr.mxu0 0.0
    %424 = vmatpush1.xpose.msra.mxu0 0.0
    %425 = vmatprep.subr.mxu0 0.0
    %426 = vmatpush1.xpose.msra.mxu0 0.0
    %427 = vmatprep.subr.mxu0 0.0
    %428 = vmatpush1.xpose.msra.mxu0 0.0
    %429 = vmatprep.subr.mxu0 0.0
    %430 = vmatpush1.xpose.msra.mxu0 0.0
    %431 = vmatprep.subr.mxu0 0.0
    %432 = vmatpush1.xpose.msra.mxu0 %v399
    %433 = vmatprep.subr.mxu0 0.0
    %434 = vmatpush2.xpose.msra.mxu0 0.0
    %435 = vmatprep.subr.mxu0 0.0
    %436 = vmatpush2.xpose.msra.mxu0 0.0
    %437 = vmatprep.subr.mxu0 0.0
    %438 = vmatpush2.xpose.msra.mxu0 0.0
    %439 = vmatprep.subr.mxu0 0.0
    %440 = vmatpush2.xpose.msra.mxu0 0.0
    %441 = vmatprep.subr.mxu0 0.0
    %442 = vmatpush2.xpose.msra.mxu0 0.0
    %443 = vmatprep.subr.mxu0 0.0
    %444 = vmatpush2.xpose.msra.mxu0 0.0
    %445 = vmatprep.subr.mxu0 0.0
    %446 = vmatpush2.xpose.msra.mxu0 0.0
    %447 = vmatprep.subr.mxu0 0.0
    %448 = vmatpush2.xpose.msra.mxu0 0.0
    %449 = vmatprep.subr.mxu0 0.0
    %450 = vmatpush2.xpose.msra.mxu0 0.0
    %451 = vmatprep.subr.mxu0 0.0
    %452 = vmatpush2.xpose.msra.mxu0 0.0
    %453 = vmatprep.subr.mxu0 0.0
    %454 = vmatpush2.xpose.msra.mxu0 0.0
    %455 = vmatprep.subr.mxu0 0.0
    %456 = vmatpush2.xpose.msra.mxu0 0.0
    %457 = vmatprep.subr.mxu0 0.0
    %458 = vmatpush2.xpose.msra.mxu0 0.0
    %459 = vmatprep.subr.mxu0 0.0
    %460 = vmatpush2.xpose.msra.mxu0 0.0
    %461 = vmatprep.subr.mxu0 0.0
    %462 = vmatpush2.xpose.msra.mxu0 0.0
    %463 = vmatprep.subr.mxu0 0.0
    %464 = vmatpush2.xpose.msra.mxu0 0.0
    %465 = vmatprep.mubr.f32.mxu0 0.0
    %466 = vmatmul.mubr.f32.gmra.mxu0 %v396
    %v467 = vpop.f32.mrf.mxu0
    %v468 = vadd.f32 0.0, %v467
    %v469 = vpop.f32.mrf.mxu0
    %470 = vdwg.mxu0
    %v471 = vmax.f32 %v468, 0.0
    %vm472 = vcmask 31744
    %v474 = vsel %vm472, %v471, 0
    %v477 = vsel %vm472, %v174, 0
    %v480 = vsel %vm472, %v175, 0
    %v483 = vsel %vm472, %v176, 0
    %v486 = vsel %vm472, %v177, 0
    %v489 = vsel %vm472, %v178, 0
    %v492 = vsel %vm472, %v179, 0
    %v495 = vsel %vm472, %v180, 0
    %v498 = vsel %vm472, %v181, 0
    %500 = vmatprep.subr.mxu0 0.0
    %501 = vmatpush1.xpose.msra.mxu0 0.0
    %502 = vmatprep.subr.mxu0 0.0
    %503 = vmatpush1.xpose.msra.mxu0 0.0
    %504 = vmatprep.subr.mxu0 0.0
    %505 = vmatpush1.xpose.msra.mxu0 0.0
    %506 = vmatprep.subr.mxu0 0.0
    %507 = vmatpush1.xpose.msra.mxu0 0.0
    %508 = vmatprep.subr.mxu0 0.0
    %509 = vmatpush1.xpose.msra.mxu0 0.0
    %510 = vmatprep.subr.mxu0 0.0
    %511 = vmatpush1.xpose.msra.mxu0 0.0
    %512 = vmatprep.subr.mxu0 0.0
    %513 = vmatpush1.xpose.msra.mxu0 0.0
    %514 = vmatprep.subr.mxu0 0.0
    %515 = vmatpush1.xpose.msra.mxu0 0.0
    %516 = vmatprep.subr.mxu0 0.0
    %517 = vmatpush1.xpose.msra.mxu0 %v498
    %518 = vmatprep.subr.mxu0 0.0
    %519 = vmatpush1.xpose.msra.mxu0 %v495
    %520 = vmatprep.subr.mxu0 0.0
    %521 = vmatpush1.xpose.msra.mxu0 %v492
    %522 = vmatprep.subr.mxu0 0.0
    %523 = vmatpush1.xpose.msra.mxu0 %v489
    %524 = vmatprep.subr.mxu0 0.0
    %525 = vmatpush1.xpose.msra.mxu0 %v486
    %526 = vmatprep.subr.mxu0 0.0
    %527 = vmatpush1.xpose.msra.mxu0 %v483
    %528 = vmatprep.subr.mxu0 0.0
    %529 = vmatpush1.xpose.msra.mxu0 %v480
    %530 = vmatprep.subr.mxu0 0.0
    %531 = vmatpush1.xpose.msra.mxu0 %v477
    %532 = vmatprep.subr.mxu0 0.0
    %533 = vmatpush2.xpose.msra.mxu0 0.0
    %534 = vmatprep.subr.mxu0 0.0
    %535 = vmatpush2.xpose.msra.mxu0 0.0
    %536 = vmatprep.subr.mxu0 0.0
    %537 = vmatpush2.xpose.msra.mxu0 0.0
    %538 = vmatprep.subr.mxu0 0.0
    %539 = vmatpush2.xpose.msra.mxu0 0.0
    %540 = vmatprep.subr.mxu0 0.0
    %541 = vmatpush2.xpose.msra.mxu0 0.0
    %542 = vmatprep.subr.mxu0 0.0
    %543 = vmatpush2.xpose.msra.mxu0 0.0
    %544 = vmatprep.subr.mxu0 0.0
    %545 = vmatpush2.xpose.msra.mxu0 0.0
    %546 = vmatprep.subr.mxu0 0.0
    %547 = vmatpush2.xpose.msra.mxu0 0.0
    %548 = vmatprep.subr.mxu0 0.0
    %549 = vmatpush2.xpose.msra.mxu0 0.0
    %550 = vmatprep.subr.mxu0 0.0
    %551 = vmatpush2.xpose.msra.mxu0 0.0
    %552 = vmatprep.subr.mxu0 0.0
    %553 = vmatpush2.xpose.msra.mxu0 0.0
    %554 = vmatprep.subr.mxu0 0.0
    %555 = vmatpush2.xpose.msra.mxu0 0.0
    %556 = vmatprep.subr.mxu0 0.0
    %557 = vmatpush2.xpose.msra.mxu0 0.0
    %558 = vmatprep.subr.mxu0 0.0
    %559 = vmatpush2.xpose.msra.mxu0 0.0
    %560 = vmatprep.subr.mxu0 0.0
    %561 = vmatpush2.xpose.msra.mxu0 0.0
    %562 = vmatprep.subr.mxu0 0.0
    %563 = vmatpush2.xpose.msra.mxu0 0.0
    %564 = vmatprep.mubr.f32.mxu0 0.0
    %565 = vmatmul.mubr.f32.gmra.mxu0 %v474
    %v566 = vpop.f32.mrf.mxu0
    %v567 = vadd.f32 0.0, %v566
    %v568 = vpop.f32.mrf.mxu0
    %569 = vdwg.mxu0
    %v571 = vrot.slane %v567, 2
    %v573 = vadd.f32 %v567, %v571
    %v574 = vxor.u32 %v573, 2147483648
    %v575 = vmul.f32 %v574, 1.442695
    %v576 = vpow.pop %v575
    %v577 = vadd.f32 %v576, 1.0
    %v578 = vrcp.pop %v577
    %v579 = vmul.f32 1.0, %v578
    %v580 = vlaneseq
    %v581 = vshrl.u32 %v580, 7
    %v582 = vsub.s32 0, %v581
    %v583 = vrot.slane %v579, %v582
    %585 = vbcast.lane.b32.xlu0 %v583, 256
    %v586 = vpop.permute.xlu0 %585
    %s588 = sor.u32 256, 8
    %589 = vbcast.lane.b32.xlu0 %v583, %s588
    %v590 = vpop.permute.xlu0 %589
    %s592 = sor.u32 256, 16
    %593 = vbcast.lane.b32.xlu0 %v583, %s592
    %v594 = vpop.permute.xlu0 %593
    %s596 = sor.u32 256, 24
    %597 = vbcast.lane.b32.xlu0 %v583, %s596
    %v598 = vpop.permute.xlu0 %597
    %s600 = sor.u32 256, 32
    %601 = vbcast.lane.b32.xlu0 %v583, %s600
    %v602 = vpop.permute.xlu0 %601
    %s604 = sor.u32 256, 40
    %605 = vbcast.lane.b32.xlu0 %v583, %s604
    %v606 = vpop.permute.xlu0 %605
    %s608 = sor.u32 256, 48
    %609 = vbcast.lane.b32.xlu0 %v583, %s608
    %v610 = vpop.permute.xlu0 %609
    %s612 = sor.u32 256, 56
    %613 = vbcast.lane.b32.xlu0 %v583, %s612
    %v614 = vpop.permute.xlu0 %613
    %v615 = vlaneseq
    %v616 = vshrl.u32 %v615, 7
    %v617 = vsub.s32 1, %v616
    %v618 = vrot.slane %v579, %v617
    %620 = vbcast.lane.b32.xlu0 %v618, 256
    %v621 = vpop.permute.xlu0 %620
    %s623 = sor.u32 256, 8
    %624 = vbcast.lane.b32.xlu0 %v618, %s623
    %v625 = vpop.permute.xlu0 %624
    %s627 = sor.u32 256, 16
    %628 = vbcast.lane.b32.xlu0 %v618, %s627
    %v629 = vpop.permute.xlu0 %628
    %s631 = sor.u32 256, 24
    %632 = vbcast.lane.b32.xlu0 %v618, %s631
    %v633 = vpop.permute.xlu0 %632
    %s635 = sor.u32 256, 32
    %636 = vbcast.lane.b32.xlu0 %v618, %s635
    %v637 = vpop.permute.xlu0 %636
    %s639 = sor.u32 256, 40
    %640 = vbcast.lane.b32.xlu0 %v618, %s639
    %v641 = vpop.permute.xlu0 %640
    %s643 = sor.u32 256, 48
    %644 = vbcast.lane.b32.xlu0 %v618, %s643
    %v645 = vpop.permute.xlu0 %644
    %s647 = sor.u32 256, 56
    %648 = vbcast.lane.b32.xlu0 %v618, %s647
    %v649 = vpop.permute.xlu0 %648
    %v650 = vmul.f32 %v586, %v29
    %v651 = vmul.f32 %v586, %v30
    %v652 = vmul.f32 %v590, %v31
    %v653 = vmul.f32 %v590, %v32
    %v654 = vmul.f32 %v594, %v33
    %v655 = vmul.f32 %v594, %v34
    %v656 = vmul.f32 %v598, %v35
    %v657 = vmul.f32 %v598, %v36
    %v658 = vmul.f32 %v602, %v37
    %v659 = vmul.f32 %v602, %v38
    %v660 = vmul.f32 %v606, %v39
    %v661 = vmul.f32 %v606, %v40
    %v662 = vmul.f32 %v610, %v41
    %v663 = vmul.f32 %v610, %v42
    %v664 = vmul.f32 %v614, %v43
    %v665 = vmul.f32 %v614, %v44
    %v666 = vmul.f32 %v621, %v45
    %v667 = vmul.f32 %v621, %v46
    %v668 = vmul.f32 %v625, %v47
    %v669 = vmul.f32 %v625, %v48
    %v670 = vmul.f32 %v629, %v49
    %v671 = vmul.f32 %v629, %v50
    %v672 = vmul.f32 %v633, %v51
    %v673 = vmul.f32 %v633, %v52
    %v674 = vmul.f32 %v637, %v53
    %v675 = vmul.f32 %v637, %v54
    %v676 = vmul.f32 %v641, %v55
    %v677 = vmul.f32 %v641, %v56
    %v678 = vmul.f32 %v645, %v57
    %v679 = vmul.f32 %v645, %v58
    %v680 = vmul.f32 %v649, %v59
    %v681 = vmul.f32 %v649, %v60
    %682 = vst [vmem:[#allocation5] sm:$0xff] %v650
    %683 = vst [vmem:[#allocation5 + $0x8] sm:$0xff] %v651
    %684 = vst [vmem:[#allocation5 + $0x10] sm:$0xff] %v652
    %685 = vst [vmem:[#allocation5 + $0x18] sm:$0xff] %v653
    %686 = vst [vmem:[#allocation5 + $0x20] sm:$0xff] %v654
    %687 = vst [vmem:[#allocation5 + $0x28] sm:$0xff] %v655
    %688 = vst [vmem:[#allocation5 + $0x30] sm:$0xff] %v656
    %689 = vst [vmem:[#allocation5 + $0x38] sm:$0xff] %v657
    %690 = vst [vmem:[#allocation5 + $0x40] sm:$0xff] %v658
    %691 = vst [vmem:[#allocation5 + $0x48] sm:$0xff] %v659
    %692 = vst [vmem:[#allocation5 + $0x50] sm:$0xff] %v660
    %693 = vst [vmem:[#allocation5 + $0x58] sm:$0xff] %v661
    %694 = vst [vmem:[#allocation5 + $0x60] sm:$0xff] %v662
    %695 = vst [vmem:[#allocation5 + $0x68] sm:$0xff] %v663
    %696 = vst [vmem:[#allocation5 + $0x70] sm:$0xff] %v664
    %697 = vst [vmem:[#allocation5 + $0x78] sm:$0xff] %v665
    %698 = vst [vmem:[#allocation5 + $0x80] sm:$0xff] %v666
    %699 = vst [vmem:[#allocation5 + $0x88] sm:$0xff] %v667
    %700 = vst [vmem:[#allocation5 + $0x90] sm:$0xff] %v668
    %701 = vst [vmem:[#allocation5 + $0x98] sm:$0xff] %v669
    %702 = vst [vmem:[#allocation5 + $0xa0] sm:$0xff] %v670
    %703 = vst [vmem:[#allocation5 + $0xa8] sm:$0xff] %v671
    %704 = vst [vmem:[#allocation5 + $0xb0] sm:$0xff] %v672
    %705 = vst [vmem:[#allocation5 + $0xb8] sm:$0xff] %v673
    %706 = vst [vmem:[#allocation5 + $0xc0] sm:$0xff] %v674
    %707 = vst [vmem:[#allocation5 + $0xc8] sm:$0xff] %v675
    %708 = vst [vmem:[#allocation5 + $0xd0] sm:$0xff] %v676
    %709 = vst [vmem:[#allocation5 + $0xd8] sm:$0xff] %v677
    %710 = vst [vmem:[#allocation5 + $0xe0] sm:$0xff] %v678
    %711 = vst [vmem:[#allocation5 + $0xe8] sm:$0xff] %v679
    %712 = vst [vmem:[#allocation5 + $0xf0] sm:$0xff] %v680
    %713 = vst [vmem:[#allocation5 + $0xf8] sm:$0xff] %v681
    // Predicated region
    $region18: #{tpu_custom_call.1} parent=1 // pred_check
      _
    $region19: #{tpu_custom_call.1} parent=1 // pred_check_branch
      %715 = sbr.rel (0) target = $region21
    $region20: #{tpu_custom_call.1} parent=1 // pred_region
      %s717 = ssub.s32 4096, 4096
      %718 = vsyncadd [#allocation4], %s717
      %s719 = sshll.u32 [#allocation5], 4
      %s720 = int_to_ptr.vmem [resolvable:$true] %s719
      %725 = dma.vmem_to_hbm [thread:$0]  %s720, 4096, %s3, [#allocation4], 256, 256, 16
    $region21: #{tpu_custom_call.1} parent=1 // pred_fallthru
      _
    // Predicated region
    $region22: #{tpu_custom_call.1} parent=1 // pred_check
      _
    $region23: #{tpu_custom_call.1} parent=1 // pred_check_branch
      %727 = sbr.rel (0) target = $region25
    $region24: #{tpu_custom_call.1} parent=1 // pred_region
      %728 = dma.done [#allocation4], 4096
    $region25: #{tpu_custom_call.1} parent=1 // pred_fallthru
      _
    %729 = vsyncpa [#allocation3], 1
    %730 = vsyncpa [#allocation4], 1

</llo_original>
